<compile_context>
chip_gen: v7x
topology: tpu7x:2x2x1
jax: 0.10.0
libtpu: 0.0.40
codegen_flags: <defaults>
</compile_context>

<pallas_src>
import functools

import jax
import jax.numpy as jnp
from jax.experimental import pallas as pl
from jax.experimental.pallas import tpu as pltpu


def _round_up(x, m):
    return ((x + m - 1) // m) * m


def rule_weights_kernel(probs_ref, idx_ref, out_ref):
    # probs_ref: (C, E) float32 in SMEM  -- softmax(table, -1), precomputed
    # idx_ref:   (TR, L) int32           -- vreg-dense class indices
    # out_ref:   (E, TR, L) float32      -- gathered probabilities, row-major
    idx = idx_ref[...]                               # (TR, L)
    num_classes, emb_dim = probs_ref.shape

    # One compare per class; masks reused for every output row (VPU only).
    masks = [idx == cls for cls in range(num_classes)]

    # Row 0 via SMEM-scalar splat + select chain.
    row0 = jnp.zeros(idx.shape, dtype=jnp.float32)
    for cls in range(num_classes):
        row0 = jnp.where(masks[cls], probs_ref[cls, 0], row0)
    out_ref[0] = row0                                # full-lane unmasked store

    if emb_dim == 2:
        # softmax rows sum to 1, so p1 = 1 - p0. Mask keeps out-of-range
        # indices at (0, 0) instead of (0, 1).
        valid = (idx >= 0) & (idx < num_classes)
        out_ref[1] = jnp.where(valid, 1.0 - row0, 0.0)
    else:
        for j in range(1, emb_dim):
            row = jnp.zeros(idx.shape, dtype=jnp.float32)
            for cls in range(num_classes):
                row = jnp.where(masks[cls], probs_ref[cls, j], row)
            out_ref[j] = row


@functools.partial(
    jax.jit, static_argnames=("max_lanes", "max_rows", "lane_major"))
def rule_weights_forward(x, table, *, max_lanes=1024, max_rows=512,
                         lane_major=False):
    """softmax(table, -1)[x.reshape(-1)] == softmax(table[x.reshape(-1)], -1).

    x: integer array of any shape; table: (num_classes, emb_dim) float32.
    Returns (x.size, emb_dim) float32 (module layout), or the lane-major
    (emb_dim, x.size) slab if lane_major=True (skips the transpose pass).
    """
    idx = x.reshape(-1).astype(jnp.int32)
    n = idx.shape[0]
    c, e = table.shape

    # Softmax hoisted out of the per-row path: it only touches the CxE table.
    probs = jax.nn.softmax(table.astype(jnp.float32), axis=-1)

    # --- vreg-dense 2-D layout: (rows, lanes) with lanes % 128 == 0. ---
    lane = min(max_lanes, _round_up(n, 128))
    rem = n % lane
    if rem:
        # TODO(synk): replace this (< lane-element) pad copy with an in-kernel
        # masked tail tile (pl.BoundedSlice / pl.when) to avoid any XLA pass.
        idx = jnp.pad(idx, (0, lane - rem))
    n_pad = idx.shape[0]
    r_total = n_pad // lane
    idx2d = idx.reshape(r_total, lane)               # free reshape (row-major)

    # Row-tile: multiple of 8 sublanes, aiming for >= 4 grid steps (v7x
    # megacore) while capping per-step VMEM at ~6 MiB payload (~12 MiB
    # double-buffered) so it fits v7x's 64 MiB VMEM with the default scoped
    # limit — no vmem_limit_bytes override needed.
    if r_total >= 32:
        tr = min(max_rows, _round_up(pl.cdiv(r_total, 4), 8))
    else:
        tr = r_total                                 # single full-dim block

    grid = (pl.cdiv(r_total, tr),)                   # ragged edge block is OK

    out = pl.pallas_call(
        rule_weights_kernel,
        out_shape=jax.ShapeDtypeStruct((e, r_total, lane), jnp.float32),
        grid=grid,
        in_specs=[
            # Tiny softmaxed table lives in SMEM; scalar reads are cheap.
            pl.BlockSpec(memory_space=pltpu.MemorySpace.SMEM),
            pl.BlockSpec((tr, lane), lambda i: (i, 0)),
        ],
        out_specs=pl.BlockSpec((e, tr, lane), lambda i: (0, i, 0)),
        compiler_params=pltpu.CompilerParams(
            dimension_semantics=("parallel",)),
    )(probs, idx2d)

    out = out.reshape(e, n_pad)[:, :n]               # (E, N), lane-major
    if lane_major:
        return out
    # Module semantics require (N, E); this transpose is one extra mem-bound
    # XLA pass — consumers that accept (E, N) should pass lane_major=True.
    return out.T


if __name__ == "__main__":
    num_classes = 6
    emb_dim = 2          # nn.Embedding(num_classes, 2) per the module __init__

    key = jax.random.PRNGKey(0)
    k_table, k_idx, k_idx2 = jax.random.split(key, 3)

    # Deterministic "weights" for the embedding table (like nn.Embedding init).
    table = jax.random.normal(k_table, (num_classes, emb_dim), dtype=jnp.float32)

    # Small integer input; forward flattens it, so any index shape works.
    x = jax.random.randint(k_idx, (2, 4), 0, num_classes, dtype=jnp.int32)

    out = rule_weights_forward(x, table)
    out = jax.block_until_ready(out)

    # Reference check in plain JAX (gather-then-softmax ordering).
    ref = jax.nn.softmax(table[x.reshape(-1)], axis=-1)
    assert out.shape == (x.size, emb_dim)
    assert jnp.allclose(out, ref, atol=1e-6, rtol=1e-6)

    # Second check exercising the multi-row / multi-grid-step / padded-tail
    # path (still tiny: ~34K indices).
    x2 = jax.random.randint(k_idx2, (33, 1039), 0, num_classes, dtype=jnp.int32)
    out2 = jax.block_until_ready(rule_weights_forward(x2, table))
    ref2 = jax.nn.softmax(table[x2.reshape(-1)], axis=-1)
    assert out2.shape == (x2.size, emb_dim)
    assert jnp.allclose(out2, ref2, atol=1e-6, rtol=1e-6)

    print("KERNEL_OK")
</pallas_src>

<mosaic_0001>
module attributes {stable_mosaic.version = 11 : i64} {
  func.func @rule_weights_kernel(%arg0: i32, %arg1: memref<6x2xf32, #tpu.memory_space<smem>>, %arg2: memref<1x128xi32, #tpu.memory_space<vmem>>, %arg3: memref<2x1x128xf32, #tpu.memory_space<vmem>>) attributes {dimension_semantics = [#tpu.dimension_semantics<parallel>], iteration_bounds = array<i64: 1>, scalar_prefetch = 0 : i64, scratch_operands = 0 : i64, tpu.core_type = #tpu.core_type<tc>, window_params = [{transform_indices = @transform_0, window_bounds = array<i64: 6, 2>}, {transform_indices = @transform_1, window_bounds = array<i64: 1, 128>}, {transform_indices = @transform_2, window_bounds = array<i64: 2, 1, 128>}]} {
    %c0 = arith.constant 0 : index
    %c0_0 = arith.constant 0 : index
    %0 = vector.load %arg2[%c0, %c0_0] : memref<1x128xi32, #tpu.memory_space<vmem>>, vector<1x128xi32>
    %c0_i32 = arith.constant 0 : i32
    %1 = vector.broadcast %c0_i32 : i32 to vector<1x128xi32>
    %2 = arith.cmpi eq, %0, %1 : vector<1x128xi32>
    %c1_i32 = arith.constant 1 : i32
    %3 = vector.broadcast %c1_i32 : i32 to vector<1x128xi32>
    %4 = arith.cmpi eq, %0, %3 : vector<1x128xi32>
    %c2_i32 = arith.constant 2 : i32
    %5 = vector.broadcast %c2_i32 : i32 to vector<1x128xi32>
    %6 = arith.cmpi eq, %0, %5 : vector<1x128xi32>
    %c3_i32 = arith.constant 3 : i32
    %7 = vector.broadcast %c3_i32 : i32 to vector<1x128xi32>
    %8 = arith.cmpi eq, %0, %7 : vector<1x128xi32>
    %c4_i32 = arith.constant 4 : i32
    %9 = vector.broadcast %c4_i32 : i32 to vector<1x128xi32>
    %10 = arith.cmpi eq, %0, %9 : vector<1x128xi32>
    %c5_i32 = arith.constant 5 : i32
    %11 = vector.broadcast %c5_i32 : i32 to vector<1x128xi32>
    %12 = arith.cmpi eq, %0, %11 : vector<1x128xi32>
    %cst = arith.constant 0.000000e+00 : f32
    %13 = vector.broadcast %cst : f32 to vector<1x128xf32>
    %c0_1 = arith.constant 0 : index
    %c0_2 = arith.constant 0 : index
    %14 = memref.load %arg1[%c0_1, %c0_2] : memref<6x2xf32, #tpu.memory_space<smem>>
    %15 = vector.broadcast %14 : f32 to vector<1x128xf32>
    %16 = arith.select %2, %15, %13 : vector<1x128xi1>, vector<1x128xf32>
    %c1 = arith.constant 1 : index
    %c0_3 = arith.constant 0 : index
    %17 = memref.load %arg1[%c1, %c0_3] : memref<6x2xf32, #tpu.memory_space<smem>>
    %18 = vector.broadcast %17 : f32 to vector<1x128xf32>
    %19 = arith.select %4, %18, %16 : vector<1x128xi1>, vector<1x128xf32>
    %c2 = arith.constant 2 : index
    %c0_4 = arith.constant 0 : index
    %20 = memref.load %arg1[%c2, %c0_4] : memref<6x2xf32, #tpu.memory_space<smem>>
    %21 = vector.broadcast %20 : f32 to vector<1x128xf32>
    %22 = arith.select %6, %21, %19 : vector<1x128xi1>, vector<1x128xf32>
    %c3 = arith.constant 3 : index
    %c0_5 = arith.constant 0 : index
    %23 = memref.load %arg1[%c3, %c0_5] : memref<6x2xf32, #tpu.memory_space<smem>>
    %24 = vector.broadcast %23 : f32 to vector<1x128xf32>
    %25 = arith.select %8, %24, %22 : vector<1x128xi1>, vector<1x128xf32>
    %c4 = arith.constant 4 : index
    %c0_6 = arith.constant 0 : index
    %26 = memref.load %arg1[%c4, %c0_6] : memref<6x2xf32, #tpu.memory_space<smem>>
    %27 = vector.broadcast %26 : f32 to vector<1x128xf32>
    %28 = arith.select %10, %27, %25 : vector<1x128xi1>, vector<1x128xf32>
    %c5 = arith.constant 5 : index
    %c0_7 = arith.constant 0 : index
    %29 = memref.load %arg1[%c5, %c0_7] : memref<6x2xf32, #tpu.memory_space<smem>>
    %30 = vector.broadcast %29 : f32 to vector<1x128xf32>
    %31 = arith.select %12, %30, %28 : vector<1x128xi1>, vector<1x128xf32>
    %c0_8 = arith.constant 0 : index
    %c0_9 = arith.constant 0 : index
    %c0_10 = arith.constant 0 : index
    %32 = vector.load %arg3[%c0_8, %c0_9, %c0_10] : memref<2x1x128xf32, #tpu.memory_space<vmem>>, vector<1x1x128xf32>
    %33 = vector.shape_cast %32 : vector<1x1x128xf32> to vector<1x128xf32>
    %34 = vector.shape_cast %31 : vector<1x128xf32> to vector<1x1x128xf32>
    tpu.vector_store %arg3[%c0_8, %c0_9, %c0_10], %34 {strides = array<i32>} : memref<2x1x128xf32, #tpu.memory_space<vmem>>, vector<1x1x128xf32>,
    %c0_i32_11 = arith.constant 0 : i32
    %35 = vector.broadcast %c0_i32_11 : i32 to vector<1x128xi32>
    %36 = arith.cmpi sge, %0, %35 : vector<1x128xi32>
    %c6_i32 = arith.constant 6 : i32
    %37 = vector.broadcast %c6_i32 : i32 to vector<1x128xi32>
    %38 = arith.cmpi slt, %0, %37 : vector<1x128xi32>
    %39 = arith.andi %36, %38 : vector<1x128xi1>
    %cst_12 = arith.constant 1.000000e+00 : f32
    %40 = vector.broadcast %cst_12 : f32 to vector<1x128xf32>
    %41 = arith.subf %40, %31 : vector<1x128xf32>
    %cst_13 = arith.constant 0.000000e+00 : f32
    %42 = vector.broadcast %cst_13 : f32 to vector<1x128xf32>
    %43 = arith.select %39, %41, %42 : vector<1x128xi1>, vector<1x128xf32>
    %c1_14 = arith.constant 1 : index
    %c0_15 = arith.constant 0 : index
    %c0_16 = arith.constant 0 : index
    %44 = vector.load %arg3[%c1_14, %c0_15, %c0_16] : memref<2x1x128xf32, #tpu.memory_space<vmem>>, vector<1x1x128xf32>
    %45 = vector.shape_cast %44 : vector<1x1x128xf32> to vector<1x128xf32>
    %46 = vector.shape_cast %43 : vector<1x128xf32> to vector<1x1x128xf32>
    tpu.vector_store %arg3[%c1_14, %c0_15, %c0_16], %46 {strides = array<i32>} : memref<2x1x128xf32, #tpu.memory_space<vmem>>, vector<1x1x128xf32>,
    return
  }
  func.func @transform_0(%arg0: i32) -> (i32, i32) {
    %c0_i32 = arith.constant 0 : i32
    %c0_i32_0 = arith.constant 0 : i32
    %c0_i32_1 = arith.constant 0 : i32
    return %c0_i32, %c0_i32_0 : i32, i32
  }
  func.func @transform_1(%arg0: i32) -> (i32, i32) {
    %c0_i32 = arith.constant 0 : i32
    %c0_i32_0 = arith.constant 0 : i32
    return %arg0, %c0_i32 : i32, i32
  }
  func.func @transform_2(%arg0: i32) -> (i32, i32, i32) {
    %c0_i32 = arith.constant 0 : i32
    %c0_i32_0 = arith.constant 0 : i32
    %c0_i32_1 = arith.constant 0 : i32
    return %c0_i32, %arg0, %c0_i32_0 : i32, i32, i32
  }
}

</mosaic_0001>

<llo_original>
// kernel: rule_weights_forward.1
$region0: #{rule_weights_forward.1}
  #allocation0 [shape = 'u32[]', space=smem, size = 0x4, offset = 0x4, fixed_abs, tag = 'smem constant byte address 0x4 - core index']
  #allocation1 [shape = 'u32[144,128]{1,0:T(1,128)}', space=vmem, size = 0x12000, scoped, tag = 'internal scratch']
  %s0 = inlined_call_operand.vmem [shape: f32[6,2], index: 0, kind: input, shape index: {}]
  %s1 = inlined_call_operand.vmem [shape: s32[1,128], index: 1, kind: input, shape index: {}]
  %s2 = inlined_call_operand.vmem [shape: f32[2,1,128], index: 2, kind: output, shape index: {}]
  %s3 = sld [smem:[#allocation0]]
  $region22: #{rule_weights_forward.1} parent=0
    _
  %s5 = ssub.s32 1, %s3
  %s6 = scalar_select 0, %s5, %s3
  $region1: #{rule_weights_forward.1} parent=0
    #allocation2 [shape = 'u8[4096]{0}', space=smem, size = 0x1000, scoped, tag = 'input window, operand 0, single buffered']
    #allocation3 [shape = 's32[1]{0}', space=sflag, size = 0x4, scoped, tag = 'scoped memory for rule_weights_forward.1']
    %7 = vsyncpa [#allocation3], 0
    // Predicated region
    $region2: #{rule_weights_forward.1} parent=1 // pred_check
      _
    $region3: #{rule_weights_forward.1} parent=1 // pred_check_branch
      %9 = sbr.rel (0) target = $region5
    $region4: #{rule_weights_forward.1} parent=1 // pred_region
      %s11 = ssub.s32 128, 128
      %12 = vsyncadd [#allocation3], %s11
      %s14 = sshll.u32 %s0, 4
      %s15 = int_to_ptr.vmem [resolvable:$true] %s14
      %17 = dma.vmem_to_smem %s15, 128, [#allocation2], [#allocation3]
    $region5: #{rule_weights_forward.1} parent=1 // pred_fallthru
      _
    // Predicated region
    $region6: #{rule_weights_forward.1} parent=1 // pred_check
      _
    $region7: #{rule_weights_forward.1} parent=1 // pred_check_branch
      %19 = sbr.rel (0) target = $region9
    $region8: #{rule_weights_forward.1} parent=1 // pred_region
      _
    $region9: #{rule_weights_forward.1} parent=1 // pred_fallthru
      _
    // Predicated region
    $region10: #{rule_weights_forward.1} parent=1 // pred_check
      _
    $region11: #{rule_weights_forward.1} parent=1 // pred_check_branch
      %21 = sbr.rel (0) target = $region13
    $region12: #{rule_weights_forward.1} parent=1 // pred_region
      %22 = dma.done [#allocation3], 128
    $region13: #{rule_weights_forward.1} parent=1 // pred_fallthru
      _
    %23 = sfence
    %v24 = vld [vmem:[%s1] sm:$0x1]
    %vm25 = vcmp.eq.s32.totalorder %v24, 0
    %vm26 = vcmp.eq.s32.totalorder %v24, 1
    %vm27 = vcmp.eq.s32.totalorder %v24, 2
    %vm28 = vcmp.eq.s32.totalorder %v24, 3
    %vm29 = vcmp.eq.s32.totalorder %v24, 4
    %vm30 = vcmp.eq.s32.totalorder %v24, 5
    %s31 = sld [smem:[#allocation2]]
    %v32 = vstv %s31
    %v33 = vsel %vm25, %v32, 0.0
    %s34 = sld [smem:[#allocation2 + $0x80]]
    %v35 = vstv %s34
    %v36 = vsel %vm26, %v35, %v33
    %s37 = sld [smem:[#allocation2 + $0x100]]
    %v38 = vstv %s37
    %v39 = vsel %vm27, %v38, %v36
    %s40 = sld [smem:[#allocation2 + $0x180]]
    %v41 = vstv %s40
    %v42 = vsel %vm28, %v41, %v39
    %s43 = sld [smem:[#allocation2 + $0x200]]
    %v44 = vstv %s43
    %v45 = vsel %vm29, %v44, %v42
    %s46 = sld [smem:[#allocation2 + $0x280]]
    %v47 = vstv %s46
    %v48 = vsel %vm30, %v47, %v45
    %49 = vst [vmem:[%s2] sm:$0x1] %v48
    %vm50 = vcmp.ge.s32.totalorder %v24, 0
    %vm51 = vcmp.lt.s32.totalorder %v24, 6
    %vm52 = vmand %vm50, %vm51
    %v53 = vsub.f32 1.0, %v48
    %v54 = vsel %vm52, %v53, 0.0
    %s55 = scalar_lea.vmem %s2, 1
    %56 = vst [vmem:[%s55] sm:$0x1] %v54
    // Predicated region
    $region14: #{rule_weights_forward.1} parent=1 // pred_check
      _
    $region15: #{rule_weights_forward.1} parent=1 // pred_check_branch
      %58 = sbr.rel (0) target = $region17
    $region16: #{rule_weights_forward.1} parent=1 // pred_region
      _
    $region17: #{rule_weights_forward.1} parent=1 // pred_fallthru
      _
    // Predicated region
    $region18: #{rule_weights_forward.1} parent=1 // pred_check
      _
    $region19: #{rule_weights_forward.1} parent=1 // pred_check_branch
      %60 = sbr.rel (0) target = $region21
    $region20: #{rule_weights_forward.1} parent=1 // pred_region
      _
    $region21: #{rule_weights_forward.1} parent=1 // pred_fallthru
      _
    %61 = vsyncpa [#allocation3], 1

</llo_original>
